<compile_context>
chip_gen: v7x
topology: tpu7x:2x2x1
jax: 0.10.0
libtpu: 0.0.40
codegen_flags: <defaults>
</compile_context>

<pallas_src>
import functools

import jax
import jax.numpy as jnp
from jax import lax
from jax.experimental import pallas as pl
from jax.experimental.pallas import tpu as pltpu

_EPS = 1e-8  # matches F.cosine_similarity default eps


def _round_up(a, b):
    return ((a + b - 1) // b) * b


def _cdiv(a, b):
    return (a + b - 1) // b


def _vmem_capacity_bytes():
    """Physical per-core VMEM; conservative v7x fallback if the query fails."""
    try:
        info = pltpu.get_tpu_info()
        cap = getattr(info, "vmem_capacity_bytes", None)
        if cap:
            return int(cap)
    except Exception:
        pass
    return 64 * 1024 * 1024


def _plan_tiles(n, c, s, itemsize):
    """Pick (bn, tile_s, vmem_limit_bytes) with padding-aware VMEM accounting."""
    capacity = _vmem_capacity_bytes()
    # Generation-aware compile limit: ~45 MiB on v7x (64 MiB VMEM), capped at
    # 96 MiB on v5e / v6e (128 MiB VMEM).
    vmem_limit = min(int(capacity * 0.7), 96 * 1024 * 1024)
    budget = int(vmem_limit * 0.6)  # headroom for output buffers / compiler temps

    sublane = {4: 8, 2: 16, 1: 32}.get(itemsize, 8)
    c_pad_in = _round_up(c, sublane)   # inputs pad C up to the sublane multiple
    c_pad_f32 = _round_up(c, 8)        # f32 working copies / products
    # Bytes per (batch element, lane column) resident for one grid step:
    #   2 inputs x 2 pipeline buffers x padded-C x itemsize   (DMA buffers)
    # + ~4 f32 intermediates of padded-C                      (casts, x*y/x*x/y*y)
    # + 1 f32 accumulator lane
    per_col = 4 * c_pad_in * itemsize + 4 * c_pad_f32 * 4 + 4

    max_cols = budget // per_col
    if max_cols < 128:
        # TODO(synk): tile over C for extremely large channel counts; fall back
        # to a 128-lane tile and grow vmem_limit below to cover it.
        tile_s = 128
    elif s <= max_cols:
        tile_s = s                               # whole spatial extent, one tile
    else:
        tile_s = max((max_cols // 128) * 128, 128)   # lane-dense multiple of 128

    bn = max(1, min(n, budget // max(per_col * tile_s, 1)))
    total_bytes = 2 * n * c * s * itemsize
    if n >= 2 and total_bytes >= (2 << 20):
        # Keep >= 2 batch blocks so v7x megacore has something to shard; for tiny
        # problems prefer a single fused block (per-grid-step overhead dominates).
        bn = min(bn, _cdiv(n, 2))

    est = per_col * tile_s * bn + (2 << 20)
    vmem_limit = max(vmem_limit, min(est, max(capacity - (8 << 20), vmem_limit)))
    return bn, tile_s, int(vmem_limit)


def _cos_loss_kernel(x_ref, y_ref, o_ref, acc_ref, *, valid_s, tile_s,
                     tiles_per_split, total_tiles, mask_needed, reduce_out):
    """One grid step processes a (BN, C, tile_s) tile of BN batch elements.

    x_ref, y_ref: VMEM tiles (BN, C, tile_s)  -- spatial on lanes, C on sublanes
    o_ref:        (BN, 1, 1) per-batch sums (reduce_out) or (BN, 1, tile_s) partials
    acc_ref:      VMEM scratch (BN, 1, tile_s) f32 running accumulator
    """
    p = pl.program_id(1)   # megacore split index
    j = pl.program_id(2)   # spatial tile within the split (reduction axis)

    @pl.when(j == 0)
    def _():
        acc_ref[...] = jnp.zeros_like(acc_ref)

    x = x_ref[...].astype(jnp.float32)
    y = y_ref[...].astype(jnp.float32)

    # Channel (sublane axis) reductions -> per-position scalars (BN, 1, tile_s).
    dot = jnp.sum(x * y, axis=1, keepdims=True)
    sxx = jnp.sum(x * x, axis=1, keepdims=True)
    syy = jnp.sum(y * y, axis=1, keepdims=True)

    eps2 = jnp.float32(_EPS * _EPS)
    # PyTorch clamps each norm separately: dot / (max(||x||,eps) * max(||y||,eps)).
    # Both rsqrt go to the EUP slot -> effectively free in this HBM-bound kernel.
    cos = dot * lax.rsqrt(jnp.maximum(sxx, eps2)) * lax.rsqrt(jnp.maximum(syy, eps2))

    if not mask_needed:
        acc_ref[...] += cos
    elif total_tiles == 1:
        # Single (ragged) tile: mask the reduced cos, not x/y (C x cheaper).
        col = lax.broadcasted_iota(jnp.int32, cos.shape, 2)
        acc_ref[...] += jnp.where(col < valid_s, cos, 0.0)
    else:
        tile_start = (p * tiles_per_split + j) * tile_s
        is_full = tile_start + tile_s <= valid_s

        @pl.when(is_full)
        def _():
            acc_ref[...] += cos

        @pl.when(jnp.logical_not(is_full))
        def _():
            col = tile_start + lax.broadcasted_iota(jnp.int32, cos.shape, 2)
            acc_ref[...] += jnp.where(col < valid_s, cos, 0.0)

    @pl.when(j == tiles_per_split - 1)
    def _():
        if reduce_out:
            # Cross-lane reduce (XLU slot): one f32 per batch element written
            # back instead of a (BN, tile_s) partials slab.
            o_ref[...] = jnp.sum(acc_ref[...], axis=2, keepdims=True)
        else:
            o_ref[...] = acc_ref[...]


def cosine_similarity_loss(x, y, *, tile_s=None, batch_block=None):
    """x, y: NCHW arrays of identical shape. Returns 1 - mean(cos_sim over dim=1)."""
    assert x.shape == y.shape, "x and y must have the same shape"
    n, c, h, w = x.shape
    s = h * w

    # Free views (no HBM data movement): NCHW -> (N, C, H*W).
    xs = x.reshape(n, c, s)
    ys = y.reshape(n, c, s)

    itemsize = max(jnp.dtype(x.dtype).itemsize, jnp.dtype(y.dtype).itemsize)
    bn_p, tile_p, vmem_limit = _plan_tiles(n, c, s, itemsize)
    bn = bn_p if batch_block is None else int(batch_block)
    tile_s = tile_p if tile_s is None else int(tile_s)
    assert tile_s == s or tile_s % 128 == 0, "tile_s must be lane-dense or full-S"
    bn = max(1, min(bn, n))

    n_blocks = _cdiv(n, bn)
    num_valid_tiles = _cdiv(s, tile_s)
    # v7x megacore fallback: when a single batch block would leave one core idle,
    # split the spatial reduction into two independent halves.
    n_splits = 2 if (n_blocks == 1 and num_valid_tiles >= 2) else 1
    tiles_per_split = _cdiv(num_valid_tiles, n_splits)
    total_tiles = n_splits * tiles_per_split
    mask_needed = total_tiles * tile_s > s
    reduce_out = (tile_s % 128 == 0)     # no physical lane padding -> safe lane reduce
    out_last = 1 if reduce_out else tile_s
    last_tile = num_valid_tiles - 1

    kernel = functools.partial(
        _cos_loss_kernel,
        valid_s=s, tile_s=tile_s, tiles_per_split=tiles_per_split,
        total_tiles=total_tiles, mask_needed=mask_needed, reduce_out=reduce_out,
    )

    def in_map(i, p, j):
        # Clamp fully out-of-range spatial tiles (only created by the megacore
        # split padding) onto the last valid tile; their contribution is masked.
        g = jnp.minimum(p * tiles_per_split + j, last_tile)
        return (i, 0, g)

    def out_map(i, p, j):
        return (p * n_blocks + i, 0, 0)

    partials = pl.pallas_call(
        kernel,
        out_shape=jax.ShapeDtypeStruct((n_splits * n_blocks * bn, 1, out_last),
                                       jnp.float32),
        grid_spec=pltpu.PrefetchScalarGridSpec(
            num_scalar_prefetch=0,
            grid=(n_blocks, n_splits, tiles_per_split),
            in_specs=[
                pl.BlockSpec((bn, c, tile_s), in_map),
                pl.BlockSpec((bn, c, tile_s), in_map),
            ],
            out_specs=pl.BlockSpec((bn, 1, out_last), out_map),
            scratch_shapes=[pltpu.VMEM((bn, 1, tile_s), jnp.float32)],
        ),
        compiler_params=pltpu.CompilerParams(
            dimension_semantics=("parallel", "parallel", "arbitrary"),
            vmem_limit_bytes=vmem_limit,
        ),
    )(xs, ys)

    # Tiny epilogue: drop padded batch rows, combine splits / lane partials.
    per = partials.reshape(n_splits, n_blocks * bn, out_last)[:, :n, :]
    total = jnp.sum(per)
    return jnp.float32(1.0) - total / jnp.float32(n * s)


def _reference(x, y):
    x = x.astype(jnp.float32)
    y = y.astype(jnp.float32)
    dot = jnp.sum(x * y, axis=1)
    nx = jnp.maximum(jnp.sqrt(jnp.sum(x * x, axis=1)), _EPS)
    ny = jnp.maximum(jnp.sqrt(jnp.sum(y * y, axis=1)), _EPS)
    return 1.0 - jnp.mean(dot / (nx * ny))


if __name__ == "__main__":
    key = jax.random.PRNGKey(0)
    k = jax.random.split(key, 8)

    # Primary CAM-like shape: single fused grid step, in-kernel lane reduce.
    x = jax.random.normal(k[0], (2, 4, 16, 16), dtype=jnp.float32)
    y = jax.random.normal(k[1], (2, 4, 16, 16), dtype=jnp.float32)
    loss = cosine_similarity_loss(x, y)
    jax.block_until_ready(loss)
    assert jnp.allclose(loss, _reference(x, y), atol=1e-5, rtol=1e-5), loss

    # Odd spatial extent (S=90): full-extent tile, lane-partials output path.
    x2 = jax.random.normal(k[2], (1, 4, 9, 10), dtype=jnp.float32)
    y2 = jax.random.normal(k[3], (1, 4, 9, 10), dtype=jnp.float32)
    l2 = cosine_similarity_loss(x2, y2)
    assert jnp.allclose(l2, _reference(x2, y2), atol=1e-5, rtol=1e-5), l2

    # Forced small tile: multi-tile reduction, ragged-tile masking, N==1
    # megacore split and the clamped fully-out-of-range tile.
    x3 = jax.random.normal(k[4], (1, 4, 16, 20), dtype=jnp.float32)
    y3 = jax.random.normal(k[5], (1, 4, 16, 20), dtype=jnp.float32)
    l3 = cosine_similarity_loss(x3, y3, tile_s=128)
    assert jnp.allclose(l3, _reference(x3, y3), atol=1e-5, rtol=1e-5), l3

    # bf16 inputs, odd channel count, forced BN=2 -> ragged last batch block.
    x4 = jax.random.normal(k[6], (3, 3, 10, 13), dtype=jnp.bfloat16)
    y4 = jax.random.normal(k[7], (3, 3, 10, 13), dtype=jnp.bfloat16)
    l4 = cosine_similarity_loss(x4, y4, batch_block=2)
    assert jnp.allclose(l4, _reference(x4, y4), atol=2e-5, rtol=2e-5), l4

    jax.block_until_ready((loss, l2, l3, l4))
    print("KERNEL_OK")
</pallas_src>

<mosaic_0001>
module attributes {stable_mosaic.version = 11 : i64} {
  func.func @_cos_loss_kernel(%arg0: i32, %arg1: i32, %arg2: i32, %arg3: memref<2x4x256xf32, #tpu.memory_space<vmem>>, %arg4: memref<2x4x256xf32, #tpu.memory_space<vmem>>, %arg5: memref<2x1x1xf32, #tpu.memory_space<vmem>>, %arg6: memref<2x1x256xf32, #tpu.memory_space<vmem>>) attributes {dimension_semantics = [#tpu.dimension_semantics<parallel>, #tpu.dimension_semantics<parallel>, #tpu.dimension_semantics<arbitrary>], iteration_bounds = array<i64: 1, 1, 1>, scalar_prefetch = 0 : i64, scratch_operands = 1 : i64, tpu.core_type = #tpu.core_type<tc>, window_params = [{transform_indices = @transform_0, window_bounds = array<i64: 2, 4, 256>}, {transform_indices = @transform_1, window_bounds = array<i64: 2, 4, 256>}, {transform_indices = @transform_2, window_bounds = array<i64: 2, 1, 1>}]} {
    %c0_i32 = arith.constant 0 : i32
    %0 = arith.cmpi eq, %arg2, %c0_i32 : i32
    %1 = arith.extui %0 : i1 to i32
    %c0_i32_0 = arith.constant 0 : i32
    %2 = arith.cmpi ne, %1, %c0_i32_0 : i32
    scf.if %2 {
      %cst_18 = arith.constant 0.000000e+00 : f32
      %28 = vector.broadcast %cst_18 : f32 to vector<2x1x256xf32>
      %c0_19 = arith.constant 0 : index
      %c0_20 = arith.constant 0 : index
      %c0_21 = arith.constant 0 : index
      %29 = vector.load %arg6[%c0_19, %c0_20, %c0_21] : memref<2x1x256xf32, #tpu.memory_space<vmem>>, vector<2x1x256xf32>
      tpu.vector_store %arg6[%c0_19, %c0_20, %c0_21], %28 {strides = array<i32>} : memref<2x1x256xf32, #tpu.memory_space<vmem>>, vector<2x1x256xf32>,
    } else {
    }
    %c0 = arith.constant 0 : index
    %c0_1 = arith.constant 0 : index
    %c0_2 = arith.constant 0 : index
    %3 = vector.load %arg3[%c0, %c0_1, %c0_2] : memref<2x4x256xf32, #tpu.memory_space<vmem>>, vector<2x4x256xf32>
    %c0_3 = arith.constant 0 : index
    %c0_4 = arith.constant 0 : index
    %c0_5 = arith.constant 0 : index
    %4 = vector.load %arg4[%c0_3, %c0_4, %c0_5] : memref<2x4x256xf32, #tpu.memory_space<vmem>>, vector<2x4x256xf32>
    %5 = arith.mulf %3, %4 : vector<2x4x256xf32>
    %cst = arith.constant dense<0.000000e+00> : vector<2x256xf32>
    %6 = vector.multi_reduction <add>, %5, %cst [1] : vector<2x4x256xf32> to vector<2x256xf32>
    %7 = vector.shape_cast %6 : vector<2x256xf32> to vector<2x1x256xf32>
    %8 = arith.mulf %3, %3 : vector<2x4x256xf32>
    %cst_6 = arith.constant dense<0.000000e+00> : vector<2x256xf32>
    %9 = vector.multi_reduction <add>, %8, %cst_6 [1] : vector<2x4x256xf32> to vector<2x256xf32>
    %10 = vector.shape_cast %9 : vector<2x256xf32> to vector<2x1x256xf32>
    %11 = arith.mulf %4, %4 : vector<2x4x256xf32>
    %cst_7 = arith.constant dense<0.000000e+00> : vector<2x256xf32>
    %12 = vector.multi_reduction <add>, %11, %cst_7 [1] : vector<2x4x256xf32> to vector<2x256xf32>
    %13 = vector.shape_cast %12 : vector<2x256xf32> to vector<2x1x256xf32>
    %cst_8 = arith.constant 1.000000e-16 : f32
    %14 = vector.broadcast %cst_8 : f32 to vector<2x1x256xf32>
    %15 = arith.maximumf %10, %14 : vector<2x1x256xf32>
    %16 = math.rsqrt %15 : vector<2x1x256xf32>
    %17 = arith.mulf %7, %16 : vector<2x1x256xf32>
    %cst_9 = arith.constant 1.000000e-16 : f32
    %18 = vector.broadcast %cst_9 : f32 to vector<2x1x256xf32>
    %19 = arith.maximumf %13, %18 : vector<2x1x256xf32>
    %20 = math.rsqrt %19 : vector<2x1x256xf32>
    %21 = arith.mulf %17, %20 : vector<2x1x256xf32>
    %c0_10 = arith.constant 0 : index
    %c0_11 = arith.constant 0 : index
    %c0_12 = arith.constant 0 : index
    %22 = vector.load %arg6[%c0_10, %c0_11, %c0_12] : memref<2x1x256xf32, #tpu.memory_space<vmem>>, vector<2x1x256xf32>
    %23 = arith.addf %22, %21 : vector<2x1x256xf32>
    %c0_13 = arith.constant 0 : index
    %c0_14 = arith.constant 0 : index
    %c0_15 = arith.constant 0 : index
    %24 = vector.load %arg6[%c0_13, %c0_14, %c0_15] : memref<2x1x256xf32, #tpu.memory_space<vmem>>, vector<2x1x256xf32>
    tpu.vector_store %arg6[%c0_13, %c0_14, %c0_15], %23 {strides = array<i32>} : memref<2x1x256xf32, #tpu.memory_space<vmem>>, vector<2x1x256xf32>,
    %c0_i32_16 = arith.constant 0 : i32
    %25 = arith.cmpi eq, %arg2, %c0_i32_16 : i32
    %26 = arith.extui %25 : i1 to i32
    %c0_i32_17 = arith.constant 0 : i32
    %27 = arith.cmpi ne, %26, %c0_i32_17 : i32
    scf.if %27 {
      %c0_18 = arith.constant 0 : index
      %c0_19 = arith.constant 0 : index
      %c0_20 = arith.constant 0 : index
      %28 = vector.load %arg6[%c0_18, %c0_19, %c0_20] : memref<2x1x256xf32, #tpu.memory_space<vmem>>, vector<2x1x256xf32>
      %cst_21 = arith.constant dense<0.000000e+00> : vector<2x1xf32>
      %29 = vector.multi_reduction <add>, %28, %cst_21 [2] : vector<2x1x256xf32> to vector<2x1xf32>
      %30 = vector.shape_cast %29 : vector<2x1xf32> to vector<2x1x1xf32>
      %c0_22 = arith.constant 0 : index
      %c0_23 = arith.constant 0 : index
      %c0_24 = arith.constant 0 : index
      %31 = vector.load %arg5[%c0_22, %c0_23, %c0_24] : memref<2x1x1xf32, #tpu.memory_space<vmem>>, vector<2x1x1xf32>
      tpu.vector_store %arg5[%c0_22, %c0_23, %c0_24], %30 {strides = array<i32>} : memref<2x1x1xf32, #tpu.memory_space<vmem>>, vector<2x1x1xf32>,
    } else {
    }
    return
  }
  func.func @transform_0(%arg0: i32, %arg1: i32, %arg2: i32) -> (i32, i32, i32) {
    %c1_i32 = arith.constant 1 : i32
    %0 = arith.muli %arg1, %c1_i32 : i32
    %1 = arith.addi %0, %arg2 : i32
    %c0_i32 = arith.constant 0 : i32
    %2 = arith.minsi %1, %c0_i32 : i32
    %c0_i32_0 = arith.constant 0 : i32
    %c0_i32_1 = arith.constant 0 : i32
    return %arg0, %c0_i32_0, %2 : i32, i32, i32
  }
  func.func @transform_1(%arg0: i32, %arg1: i32, %arg2: i32) -> (i32, i32, i32) {
    %c1_i32 = arith.constant 1 : i32
    %0 = arith.muli %arg1, %c1_i32 : i32
    %1 = arith.addi %0, %arg2 : i32
    %c0_i32 = arith.constant 0 : i32
    %2 = arith.minsi %1, %c0_i32 : i32
    %c0_i32_0 = arith.constant 0 : i32
    %c0_i32_1 = arith.constant 0 : i32
    return %arg0, %c0_i32_0, %2 : i32, i32, i32
  }
  func.func @transform_2(%arg0: i32, %arg1: i32, %arg2: i32) -> (i32, i32, i32) {
    %c1_i32 = arith.constant 1 : i32
    %0 = arith.muli %arg1, %c1_i32 : i32
    %1 = arith.addi %0, %arg0 : i32
    %c0_i32 = arith.constant 0 : i32
    %c0_i32_0 = arith.constant 0 : i32
    %c0_i32_1 = arith.constant 0 : i32
    return %1, %c0_i32, %c0_i32_0 : i32, i32, i32
  }
}

</mosaic_0001>

<llo_original>
// kernel: tpu_custom_call.1
$region0: #{tpu_custom_call.1}
  #allocation0 [shape = 'u32[]', space=smem, size = 0x4, offset = 0x4, fixed_abs, tag = 'smem constant byte address 0x4 - core index']
  #allocation1 [shape = 'u32[144,128]{1,0:T(1,128)}', space=vmem, size = 0x12000, scoped, tag = 'internal scratch']
  #allocation2 [shape = 'f32[2,1,256]{2,1,0:T(1,128)}', space=vmem, size = 0x800, scoped, tag = 'scratch operand']
  %s0 = inlined_call_operand.hbm [shape: f32[2,4,256], index: 0, kind: input, shape index: {}]
  %s1 = inlined_call_operand.hbm [shape: f32[2,4,256], index: 1, kind: input, shape index: {}]
  %s2 = inlined_call_operand.vmem [shape: f32[2,1,1], index: 2, kind: output, shape index: {}]
  %s3 = sld [smem:[#allocation0]]
  $region34: #{tpu_custom_call.1} parent=0
    _
  %s5 = ssub.s32 1, %s3
  %s6 = scalar_select 0, %s5, %s3
  $region1: #{tpu_custom_call.1} parent=0
    #allocation3 [shape = 'u8[8192]{0}', space=vmem, size = 0x2000, scoped, tag = 'input window, operand 0, single buffered']
    #allocation4 [shape = 's32[1]{0}', space=sflag, size = 0x4, scoped, tag = 'scoped memory for tpu_custom_call.1']
    #allocation5 [shape = 'u8[8192]{0}', space=vmem, size = 0x2000, scoped, tag = 'input window, operand 1, single buffered']
    #allocation6 [shape = 's32[1]{0}', space=sflag, size = 0x4, scoped, tag = 'scoped memory for tpu_custom_call.1']
    %7 = vsyncpa [#allocation4], 0
    %8 = vsyncpa [#allocation6], 0
    // Predicated region
    $region2: #{tpu_custom_call.1} parent=1 // pred_check
      _
    $region3: #{tpu_custom_call.1} parent=1 // pred_check_branch
      %10 = sbr.rel (0) target = $region5
    $region4: #{tpu_custom_call.1} parent=1 // pred_region
      %s11 = sadd.s32 0, 0
      %p12 = scmp.lt.s32.totalorder %s11, 0
      %s13 = scalar_select %p12, %s11, 0
      %s14 = smul.u32 2, %s13
      %s16 = ssub.s32 256, 256
      %17 = vsyncadd [#allocation4], %s16
      %s18 = smul.addr %s14, 64
      %s19 = scalar_lea.hbm %s0, %s18
      %s20 = sshll.u32 [#allocation3], 4
      %s21 = int_to_ptr.vmem [resolvable:$true] %s20
      %26 = dma.hbm_to_vmem [thread:$0]  %s19, 256, %s21, [#allocation4], 128, 128, 8
    $region5: #{tpu_custom_call.1} parent=1 // pred_fallthru
      _
    // Predicated region
    $region6: #{tpu_custom_call.1} parent=1 // pred_check
      _
    $region7: #{tpu_custom_call.1} parent=1 // pred_check_branch
      %28 = sbr.rel (0) target = $region9
    $region8: #{tpu_custom_call.1} parent=1 // pred_region
      %s29 = sadd.s32 0, 0
      %p30 = scmp.lt.s32.totalorder %s29, 0
      %s31 = scalar_select %p30, %s29, 0
      %s32 = smul.u32 2, %s31
      %s34 = ssub.s32 256, 256
      %35 = vsyncadd [#allocation6], %s34
      %s36 = smul.addr %s32, 64
      %s37 = scalar_lea.hbm %s1, %s36
      %s38 = sshll.u32 [#allocation5], 4
      %s39 = int_to_ptr.vmem [resolvable:$true] %s38
      %44 = dma.hbm_to_vmem [thread:$0]  %s37, 256, %s39, [#allocation6], 128, 128, 8
    $region9: #{tpu_custom_call.1} parent=1 // pred_fallthru
      _
    // Predicated region
    $region10: #{tpu_custom_call.1} parent=1 // pred_check
      _
    $region11: #{tpu_custom_call.1} parent=1 // pred_check_branch
      %46 = sbr.rel (0) target = $region13
    $region12: #{tpu_custom_call.1} parent=1 // pred_region
      %47 = dma.done [#allocation4], 256
    $region13: #{tpu_custom_call.1} parent=1 // pred_fallthru
      _
    // Predicated region
    $region14: #{tpu_custom_call.1} parent=1 // pred_check
      _
    $region15: #{tpu_custom_call.1} parent=1 // pred_check_branch
      %49 = sbr.rel (0) target = $region17
    $region16: #{tpu_custom_call.1} parent=1 // pred_region
      %50 = dma.done [#allocation6], 256
    $region17: #{tpu_custom_call.1} parent=1 // pred_fallthru
      _
    %s51 = sadd.s32 0, 0
    %s52 = smul.u32 2, %s51
    %p53 = scmp.lt.s32.totalorder %s52, 1
    %s54 = scalar_select %p53, %s52, 1
    %s55 = scalar_lea.vmem %s2, %s54
    %s56 = sadd.s32 0, 0
    %p57 = scmp.lt.s32.totalorder %s56, 0
    %s58 = scalar_select %p57, %s56, 0
    %s59 = smul.u32 2, %s58
    %s60 = sadd.s32 0, 0
    %p61 = scmp.lt.s32.totalorder %s60, 0
    %s62 = scalar_select %p61, %s60, 0
    %s63 = smul.u32 2, %s62
    %s64 = sadd.s32 0, 0
    %s65 = smul.u32 2, %s64
    %p66 = scmp.lt.s32.totalorder %s65, 1
    %s67 = scalar_select %p66, %s65, 1
    %s68 = scalar_lea.vmem %s2, %s67
    %s69 = sadd.s32 0, 0
    %s70 = smul.u32 2, %s69
    %p71 = scmp.eq.s32.totalorder 0, 0
    // Predicated region
    $region18: #{tpu_custom_call.1} parent=1 // pred_check
      %p72 = pneg %p71
    $region19: #{tpu_custom_call.1} parent=1 // pred_check_branch
      %74 = sbr.rel (%p72) target = $region21
    $region20: #{tpu_custom_call.1} parent=1 // pred_region
      %v75 = vlaneseq
      %vm76 = vcmp.ge.s32.totalorder %v75, 0
      %vm77 = vcmp.lt.s32.totalorder %v75, 256
      %vm78 = vmand %vm76, %vm77
      %79 = vst.msk [vmem:[#allocation2] sm:$0x3] %vm78, 0.0
      %80 = vst.msk [vmem:[#allocation2 + $0x2] sm:$0x3] %vm78, 0.0
    $region21: #{tpu_custom_call.1} parent=1 // pred_fallthru
      _
    %v81 = vld [vmem:[#allocation3] sm:$0xff]
    %v82 = vld [vmem:[#allocation3 + $0x8] sm:$0xff]
    %v83 = vld [vmem:[#allocation5] sm:$0xff]
    %v84 = vld [vmem:[#allocation5 + $0x8] sm:$0xff]
    %v85 = vmul.f32 %v81, %v83
    %v86 = vmul.f32 %v82, %v84
    %v89 = vcombine.high %v85, %v85
    %v90 = vcombine.high %v86, %v86
    %vm93 = vcmask 1043456
    %v94 = vsel %vm93, %v85, 0.0
    %v95 = vrot.slane %v94, 4
    %v96 = vadd.f32 %v94, %v95
    %v97 = vrot.slane %v96, 2
    %v98 = vadd.f32 %v96, %v97
    %v99 = vrot.slane %v98, 1
    %v100 = vadd.f32 %v98, %v99
    %v101 = vsel %vm93, %v89, 0.0
    %v102 = vrot.slane %v101, 4
    %v103 = vadd.f32 %v101, %v102
    %v104 = vrot.slane %v103, 2
    %v105 = vadd.f32 %v103, %v104
    %v106 = vrot.slane %v105, 1
    %v107 = vadd.f32 %v105, %v106
    %v108 = vsel %vm93, %v86, 0.0
    %v109 = vrot.slane %v108, 4
    %v110 = vadd.f32 %v108, %v109
    %v111 = vrot.slane %v110, 2
    %v112 = vadd.f32 %v110, %v111
    %v113 = vrot.slane %v112, 1
    %v114 = vadd.f32 %v112, %v113
    %v115 = vsel %vm93, %v90, 0.0
    %v116 = vrot.slane %v115, 4
    %v117 = vadd.f32 %v115, %v116
    %v118 = vrot.slane %v117, 2
    %v119 = vadd.f32 %v117, %v118
    %v120 = vrot.slane %v119, 1
    %v121 = vadd.f32 %v119, %v120
    %v122 = vmul.f32 %v81, %v81
    %v123 = vmul.f32 %v82, %v82
    %v126 = vcombine.high %v122, %v122
    %v127 = vcombine.high %v123, %v123
    %v130 = vsel %vm93, %v122, 0.0
    %v131 = vrot.slane %v130, 4
    %v132 = vadd.f32 %v130, %v131
    %v133 = vrot.slane %v132, 2
    %v134 = vadd.f32 %v132, %v133
    %v135 = vrot.slane %v134, 1
    %v136 = vadd.f32 %v134, %v135
    %v137 = vsel %vm93, %v126, 0.0
    %v138 = vrot.slane %v137, 4
    %v139 = vadd.f32 %v137, %v138
    %v140 = vrot.slane %v139, 2
    %v141 = vadd.f32 %v139, %v140
    %v142 = vrot.slane %v141, 1
    %v143 = vadd.f32 %v141, %v142
    %v144 = vsel %vm93, %v123, 0.0
    %v145 = vrot.slane %v144, 4
    %v146 = vadd.f32 %v144, %v145
    %v147 = vrot.slane %v146, 2
    %v148 = vadd.f32 %v146, %v147
    %v149 = vrot.slane %v148, 1
    %v150 = vadd.f32 %v148, %v149
    %v151 = vsel %vm93, %v127, 0.0
    %v152 = vrot.slane %v151, 4
    %v153 = vadd.f32 %v151, %v152
    %v154 = vrot.slane %v153, 2
    %v155 = vadd.f32 %v153, %v154
    %v156 = vrot.slane %v155, 1
    %v157 = vadd.f32 %v155, %v156
    %v158 = vmul.f32 %v83, %v83
    %v159 = vmul.f32 %v84, %v84
    %v162 = vcombine.high %v158, %v158
    %v163 = vcombine.high %v159, %v159
    %v166 = vsel %vm93, %v158, 0.0
    %v167 = vrot.slane %v166, 4
    %v168 = vadd.f32 %v166, %v167
    %v169 = vrot.slane %v168, 2
    %v170 = vadd.f32 %v168, %v169
    %v171 = vrot.slane %v170, 1
    %v172 = vadd.f32 %v170, %v171
    %v173 = vsel %vm93, %v162, 0.0
    %v174 = vrot.slane %v173, 4
    %v175 = vadd.f32 %v173, %v174
    %v176 = vrot.slane %v175, 2
    %v177 = vadd.f32 %v175, %v176
    %v178 = vrot.slane %v177, 1
    %v179 = vadd.f32 %v177, %v178
    %v180 = vsel %vm93, %v159, 0.0
    %v181 = vrot.slane %v180, 4
    %v182 = vadd.f32 %v180, %v181
    %v183 = vrot.slane %v182, 2
    %v184 = vadd.f32 %v182, %v183
    %v185 = vrot.slane %v184, 1
    %v186 = vadd.f32 %v184, %v185
    %v187 = vsel %vm93, %v163, 0.0
    %v188 = vrot.slane %v187, 4
    %v189 = vadd.f32 %v187, %v188
    %v190 = vrot.slane %v189, 2
    %v191 = vadd.f32 %v189, %v190
    %v192 = vrot.slane %v191, 1
    %v193 = vadd.f32 %v191, %v192
    %v194 = vmax.f32 %v136, 1e-16
    %v195 = vmax.f32 %v143, 1e-16
    %v196 = vmax.f32 %v150, 1e-16
    %v197 = vmax.f32 %v157, 1e-16
    %v198 = vrsqrt.pop %v194
    %v199 = vrsqrt.pop %v195
    %v200 = vrsqrt.pop %v196
    %v201 = vrsqrt.pop %v197
    %v202 = vmul.f32 %v100, %v198
    %v203 = vmul.f32 %v107, %v199
    %v204 = vmul.f32 %v114, %v200
    %v205 = vmul.f32 %v121, %v201
    %v206 = vmax.f32 %v172, 1e-16
    %v207 = vmax.f32 %v179, 1e-16
    %v208 = vmax.f32 %v186, 1e-16
    %v209 = vmax.f32 %v193, 1e-16
    %v210 = vrsqrt.pop %v206
    %v211 = vrsqrt.pop %v207
    %v212 = vrsqrt.pop %v208
    %v213 = vrsqrt.pop %v209
    %v214 = vmul.f32 %v202, %v210
    %v215 = vmul.f32 %v203, %v211
    %v216 = vmul.f32 %v204, %v212
    %v217 = vmul.f32 %v205, %v213
    %v218 = vld [vmem:[#allocation2] sm:$0x3]
    %v219 = vld [vmem:[#allocation2 + $0x2] sm:$0x3]
    %v224 = vcombine.low %v214, %v215
    %v226 = vunpack.c.l.s4 1966171168
    %v227 = vunpack.c.0.s8 %v226
    %v228 = vlaneseq
    %v229 = vshrl.u32 %v228, 7
    %v230 = vsub.s32 %v227, %v229
    %v231 = vrot.slane %v224, %v230
    %v233 = vunpack.c.l.s4 1966171168
    %v234 = vunpack.c.0.s8 %v233
    %v235 = vlaneseq
    %v236 = vshrl.u32 %v235, 7
    %v237 = vsub.s32 %v234, %v236
    %v238 = vrot.slane %v231, %v237
    %v239 = vcombine.low %v216, %v217
    %v241 = vunpack.c.l.s4 1966171168
    %v242 = vunpack.c.0.s8 %v241
    %v243 = vlaneseq
    %v244 = vshrl.u32 %v243, 7
    %v245 = vsub.s32 %v242, %v244
    %v246 = vrot.slane %v239, %v245
    %v248 = vunpack.c.l.s4 1966171168
    %v249 = vunpack.c.0.s8 %v248
    %v250 = vlaneseq
    %v251 = vshrl.u32 %v250, 7
    %v252 = vsub.s32 %v249, %v251
    %v253 = vrot.slane %v246, %v252
    %v256 = vadd.f32 %v218, %v238
    %v257 = vadd.f32 %v219, %v253
    %v258 = vlaneseq
    %vm259 = vcmp.ge.s32.totalorder %v258, 0
    %vm260 = vcmp.lt.s32.totalorder %v258, 256
    %vm261 = vmand %vm259, %vm260
    %262 = vst.msk [vmem:[#allocation2] sm:$0x3] %vm261, %v256
    %263 = vst.msk [vmem:[#allocation2 + $0x2] sm:$0x3] %vm261, %v257
    // Predicated region
    $region22: #{tpu_custom_call.1} parent=1 // pred_check
      %p264 = pneg %p71
    $region23: #{tpu_custom_call.1} parent=1 // pred_check_branch
      %266 = sbr.rel (%p264) target = $region25
    $region24: #{tpu_custom_call.1} parent=1 // pred_region
      %v267 = vld [vmem:[#allocation2] sm:$0x3]
      %v268 = vld [vmem:[#allocation2 + $0x2] sm:$0x3]
      %v271 = vlaneseq
      %v272 = vshrl.u32 %v271, 7
      %v273 = vsub.s32 0, %v272
      %v274 = vrot.slane %v267, %v273
      %v275 = vlaneseq
      %v276 = vshrl.u32 %v275, 7
      %v277 = vsub.s32 1, %v276
      %v278 = vrot.slane %v267, %v277
      %v279 = vlaneseq
      %v280 = vshrl.u32 %v279, 7
      %v281 = vsub.s32 0, %v280
      %v282 = vrot.slane %v268, %v281
      %v283 = vlaneseq
      %v284 = vshrl.u32 %v283, 7
      %v285 = vsub.s32 1, %v284
      %v286 = vrot.slane %v268, %v285
      %vm291 = vcmask 1040384
      %v292 = vsel %vm291, %v274, 0.0
      %v293 = vsel %vm291, %v278, 0.0
      %v294 = vadd.f32 %v292, %v293
      %295 = vadd.xlane.f32.xlu0 %v294
      %v296 = vpop.xlane.xlu0 %295
      %v297 = vsel %vm291, %v282, 0.0
      %v298 = vsel %vm291, %v286, 0.0
      %v299 = vadd.f32 %v297, %v298
      %300 = vadd.xlane.f32.xlu0 %v299
      %v301 = vpop.xlane.xlu0 %300
      %vm302 = vcmask 0
      %303 = vst.msk [vmem:[%s68] sm:$0x1] %vm302, %v296
      %304 = vst.msk [vmem:[%s68 + $0x1] sm:$0x1] %vm302, %v301
    $region25: #{tpu_custom_call.1} parent=1 // pred_fallthru
      _
    %s305 = sadd.s32 0, 0
    %s306 = smul.u32 2, %s305
    %p307 = scmp.lt.s32.totalorder %s306, 1
    %s308 = scalar_select %p307, %s306, 1
    %s309 = scalar_lea.vmem %s2, %s308
    // Predicated region
    $region26: #{tpu_custom_call.1} parent=1 // pred_check
      _
    $region27: #{tpu_custom_call.1} parent=1 // pred_check_branch
      %311 = sbr.rel (0) target = $region29
    $region28: #{tpu_custom_call.1} parent=1 // pred_region
      %s312 = sadd.s32 0, 0
      %s313 = smul.u32 2, %s312
    $region29: #{tpu_custom_call.1} parent=1 // pred_fallthru
      _
    // Predicated region
    $region30: #{tpu_custom_call.1} parent=1 // pred_check
      _
    $region31: #{tpu_custom_call.1} parent=1 // pred_check_branch
      %315 = sbr.rel (0) target = $region33
    $region32: #{tpu_custom_call.1} parent=1 // pred_region
      %s316 = sadd.s32 0, 0
      %s317 = smul.u32 2, %s316
      %p318 = scmp.lt.s32.totalorder %s317, 1
      %s319 = scalar_select %p318, %s317, 1
      %s320 = scalar_lea.vmem %s2, %s319
    $region33: #{tpu_custom_call.1} parent=1 // pred_fallthru
      _
    %321 = vsyncpa [#allocation4], 1
    %322 = vsyncpa [#allocation6], 1

</llo_original>
